<compile_context>
chip_gen: v7x
topology: tpu7x:2x2x1
jax: 0.10.0
libtpu: 0.0.40
codegen_flags: <defaults>
</compile_context>

<pallas_src>
import jax
import jax.numpy as jnp
from jax.experimental import pallas as pl
from jax.experimental.pallas import tpu as pltpu


def _embed_onehot_kernel(ids_ref, table_ref, out_ref):
    """Gather T embedding rows via a one-hot matmul on the MXU.

    ids_ref:   (T, 1) int32 tile of token ids (VMEM)
    table_ref: (V, D) full embedding table, VMEM-resident
    out_ref:   (T, D) output tile
    """
    T = out_ref.shape[0]
    V = table_ref.shape[0]

    ids = ids_ref[...]                                       # (T, 1) int32
    vocab = jax.lax.broadcasted_iota(jnp.int32, (T, V), 1)   # (T, V)
    one_hot = (ids == vocab).astype(table_ref.dtype)         # (T, V), exact 0/1

    out_ref[...] = jnp.dot(
        one_hot, table_ref[...], preferred_element_type=jnp.float32
    ).astype(out_ref.dtype)


def embedding_lookup(ids, table, *, tokens_per_tile=128):
    """ids: (B, S) int, table: (V, D) float -> (B, S, D) float."""
    B, S = ids.shape
    V, D = table.shape
    N = B * S
    T = tokens_per_tile

    # VMEM-resident table path (one-hot MXU gather).  Fine up to tens of MiB
    # of table on v5e/v6e (128 MiB VMEM) and ~half that on v7x (64 MiB).
    # TODO(synk): for very large V*D, fall back to a manual HBM row-gather
    # (table in memory_space=pl.ANY + double-buffered pltpu.make_async_copy).
    table_bytes = V * D * jnp.dtype(table.dtype).itemsize
    assert table_bytes <= 32 * 1024 * 1024, (
        "embedding table too large for the VMEM-resident one-hot path"
    )

    num_tiles = (N + T - 1) // T
    n_pad = num_tiles * T

    flat_ids = ids.reshape(-1).astype(jnp.int32)
    if n_pad != N:
        # Pad with id 0 (always a valid row); padded rows are sliced off below.
        flat_ids = jnp.pad(flat_ids, (0, n_pad - N))
    ids_col = flat_ids.reshape(n_pad, 1)   # sublane-major ids: (T, 1) tiles

    out_flat = pl.pallas_call(
        _embed_onehot_kernel,
        out_shape=jax.ShapeDtypeStruct((n_pad, D), table.dtype),
        grid_spec=pltpu.PrefetchScalarGridSpec(
            num_scalar_prefetch=0,
            grid=(num_tiles,),
            in_specs=[
                # (T, 1) tile of token ids for this grid step.
                pl.BlockSpec((T, 1), lambda i: (i, 0)),
                # Whole embedding table, same block every step (VMEM-resident).
                pl.BlockSpec((V, D), lambda i: (0, 0)),
            ],
            # Sublane-dense (T, D) output tile, written exactly once per step.
            out_specs=pl.BlockSpec((T, D), lambda i: (i, 0)),
        ),
        compiler_params=pltpu.CompilerParams(
            dimension_semantics=("parallel",),
        ),
    )(ids_col, table)

    return out_flat[:N].reshape(B, S, D)


class Embedding:
    """JAX/Pallas equivalent of the PyTorch Embedding module."""

    def __init__(self, vocab_size, embed_dim, key):
        # nn.Embedding default init: weights ~ N(0, 1)
        self.weight = jax.random.normal(
            key, (vocab_size, embed_dim), dtype=jnp.float32
        )

    def __call__(self, x):
        return embedding_lookup(x, self.weight)


if __name__ == "__main__":
    vocab_size = 16
    embed_dim = 32
    batch, seq_len = 2, 8

    key = jax.random.PRNGKey(0)
    k_w, k_ids = jax.random.split(key)

    model = Embedding(vocab_size, embed_dim, k_w)

    # Token ids (batch, seq_len); note: despite the PyTorch docstring,
    # nn.Embedding consumes integer indices, not one-hot vocab vectors.
    x = jax.random.randint(k_ids, (batch, seq_len), 0, vocab_size, dtype=jnp.int32)

    out = model(x)
    out = jax.block_until_ready(out)

    # Reference check against plain JAX gather (one-hot matmul is exact in f32).
    ref = jnp.take(model.weight, x, axis=0)
    assert out.shape == (batch, seq_len, embed_dim)
    assert jnp.allclose(out, ref), "mismatch vs reference embedding lookup"

    print("KERNEL_OK")
</pallas_src>

<mosaic_0001>
module attributes {stable_mosaic.version = 11 : i64} {
  func.func @_embed_onehot_kernel(%arg0: i32, %arg1: memref<128x1xi32, #tpu.memory_space<vmem>>, %arg2: memref<16x32xf32, #tpu.memory_space<vmem>>, %arg3: memref<128x32xf32, #tpu.memory_space<vmem>>) attributes {dimension_semantics = [#tpu.dimension_semantics<parallel>], iteration_bounds = array<i64: 1>, scalar_prefetch = 0 : i64, scratch_operands = 0 : i64, tpu.core_type = #tpu.core_type<tc>, window_params = [{transform_indices = @transform_0, window_bounds = array<i64: 128, 1>}, {pipeline_mode = #tpu.pipeline_mode<synchronous>, transform_indices = @transform_1, window_bounds = array<i64: 16, 32>}, {transform_indices = @transform_2, window_bounds = array<i64: 128, 32>}]} {
    %c0 = arith.constant 0 : index
    %c0_0 = arith.constant 0 : index
    %0 = vector.load %arg1[%c0, %c0_0] : memref<128x1xi32, #tpu.memory_space<vmem>>, vector<128x1xi32>
    %1 = tpu.iota {dimensions = array<i32: 1>} : vector<128x16xi32>
    %2 = vector.broadcast %0 : vector<128x1xi32> to vector<128x16xi32>
    %3 = arith.cmpi eq, %2, %1 : vector<128x16xi32>
    %4 = arith.extui %3 : vector<128x16xi1> to vector<128x16xi32>
    %5 = arith.sitofp %4 : vector<128x16xi32> to vector<128x16xf32>
    %c0_1 = arith.constant 0 : index
    %c0_2 = arith.constant 0 : index
    %6 = vector.load %arg2[%c0_1, %c0_2] : memref<16x32xf32, #tpu.memory_space<vmem>>, vector<16x32xf32>
    %cst = arith.constant dense<0.000000e+00> : vector<128x32xf32>
    %7 = tpu.matmul %5, %6, %cst {dimension_numbers = #tpu.dot_dimension_numbers<[1], [0], [0], [1], [0, 0, 1, 1], [], []>} : vector<128x16xf32>, vector<16x32xf32>, vector<128x32xf32> -> vector<128x32xf32>
    %c0_3 = arith.constant 0 : index
    %c0_4 = arith.constant 0 : index
    %8 = vector.load %arg3[%c0_3, %c0_4] : memref<128x32xf32, #tpu.memory_space<vmem>>, vector<128x32xf32>
    tpu.vector_store %arg3[%c0_3, %c0_4], %7 {strides = array<i32>} : memref<128x32xf32, #tpu.memory_space<vmem>>, vector<128x32xf32>,
    return
  }
  func.func @transform_0(%arg0: i32) -> (i32, i32) {
    %c0_i32 = arith.constant 0 : i32
    %c0_i32_0 = arith.constant 0 : i32
    return %arg0, %c0_i32 : i32, i32
  }
  func.func @transform_1(%arg0: i32) -> (i32, i32) {
    %c0_i32 = arith.constant 0 : i32
    %c0_i32_0 = arith.constant 0 : i32
    %c0_i32_1 = arith.constant 0 : i32
    return %c0_i32, %c0_i32_0 : i32, i32
  }
  func.func @transform_2(%arg0: i32) -> (i32, i32) {
    %c0_i32 = arith.constant 0 : i32
    %c0_i32_0 = arith.constant 0 : i32
    return %arg0, %c0_i32 : i32, i32
  }
}

</mosaic_0001>

<llo_original>
// kernel: tpu_custom_call.1
$region0: #{tpu_custom_call.1}
  #allocation0 [shape = 'u32[]', space=smem, size = 0x4, offset = 0x4, fixed_abs, tag = 'smem constant byte address 0x4 - core index']
  #allocation1 [shape = 'u32[144,128]{1,0:T(1,128)}', space=vmem, size = 0x12000, scoped, tag = 'internal scratch']
  %s0 = inlined_call_operand.vmem [shape: s32[128,1], index: 0, kind: input, shape index: {}]
  %s1 = inlined_call_operand.vmem [shape: f32[16,32], index: 1, kind: input, shape index: {}]
  %s2 = inlined_call_operand.vmem [shape: f32[128,32], index: 2, kind: output, shape index: {}]
  %s3 = sld [smem:[#allocation0]]
  $region18: #{tpu_custom_call.1} parent=0
    _
  %s5 = ssub.s32 1, %s3
  %s6 = scalar_select 0, %s5, %s3
  // Predicated region
  $region2: #{tpu_custom_call.1} parent=0 // pred_check
    _
  $region3: #{tpu_custom_call.1} parent=0 // pred_check_branch
    %8 = sbr.rel (0) target = $region5
  $region4: #{tpu_custom_call.1} parent=0 // pred_region
    _
  $region5: #{tpu_custom_call.1} parent=0 // pred_fallthru
    _
  // Predicated region
  $region6: #{tpu_custom_call.1} parent=0 // pred_check
    _
  $region7: #{tpu_custom_call.1} parent=0 // pred_check_branch
    %10 = sbr.rel (0) target = $region9
  $region8: #{tpu_custom_call.1} parent=0 // pred_region
    _
  $region9: #{tpu_custom_call.1} parent=0 // pred_fallthru
    _
  %v11 = vld [vmem:[%s0] sm:$0xff]
  %v12 = vld [vmem:[%s0 + $0x8] sm:$0xff]
  %v13 = vld [vmem:[%s0 + $0x10] sm:$0xff]
  %v14 = vld [vmem:[%s0 + $0x18] sm:$0xff]
  %v15 = vld [vmem:[%s0 + $0x20] sm:$0xff]
  %v16 = vld [vmem:[%s0 + $0x28] sm:$0xff]
  %v17 = vld [vmem:[%s0 + $0x30] sm:$0xff]
  %v18 = vld [vmem:[%s0 + $0x38] sm:$0xff]
  %v19 = vld [vmem:[%s0 + $0x40] sm:$0xff]
  %v20 = vld [vmem:[%s0 + $0x48] sm:$0xff]
  %v21 = vld [vmem:[%s0 + $0x50] sm:$0xff]
  %v22 = vld [vmem:[%s0 + $0x58] sm:$0xff]
  %v23 = vld [vmem:[%s0 + $0x60] sm:$0xff]
  %v24 = vld [vmem:[%s0 + $0x68] sm:$0xff]
  %v25 = vld [vmem:[%s0 + $0x70] sm:$0xff]
  %v26 = vld [vmem:[%s0 + $0x78] sm:$0xff]
  %v27 = vlaneseq
  %v28 = vand.u32 %v27, 127
  %29 = vset.pattern.permute.xlu0 0
  %30 = vperm.xlu0 %29, %v11
  %v31 = vpop.permute.xlu0 %30
  %32 = vset.pattern.permute.xlu0 0
  %33 = vperm.xlu0 %32, %v12
  %v34 = vpop.permute.xlu0 %33
  %35 = vset.pattern.permute.xlu0 0
  %36 = vperm.xlu0 %35, %v13
  %v37 = vpop.permute.xlu0 %36
  %38 = vset.pattern.permute.xlu0 0
  %39 = vperm.xlu0 %38, %v14
  %v40 = vpop.permute.xlu0 %39
  %41 = vset.pattern.permute.xlu0 0
  %42 = vperm.xlu0 %41, %v15
  %v43 = vpop.permute.xlu0 %42
  %44 = vset.pattern.permute.xlu0 0
  %45 = vperm.xlu0 %44, %v16
  %v46 = vpop.permute.xlu0 %45
  %47 = vset.pattern.permute.xlu0 0
  %48 = vperm.xlu0 %47, %v17
  %v49 = vpop.permute.xlu0 %48
  %50 = vset.pattern.permute.xlu0 0
  %51 = vperm.xlu0 %50, %v18
  %v52 = vpop.permute.xlu0 %51
  %53 = vset.pattern.permute.xlu0 0
  %54 = vperm.xlu0 %53, %v19
  %v55 = vpop.permute.xlu0 %54
  %56 = vset.pattern.permute.xlu0 0
  %57 = vperm.xlu0 %56, %v20
  %v58 = vpop.permute.xlu0 %57
  %59 = vset.pattern.permute.xlu0 0
  %60 = vperm.xlu0 %59, %v21
  %v61 = vpop.permute.xlu0 %60
  %62 = vset.pattern.permute.xlu0 0
  %63 = vperm.xlu0 %62, %v22
  %v64 = vpop.permute.xlu0 %63
  %65 = vset.pattern.permute.xlu0 0
  %66 = vperm.xlu0 %65, %v23
  %v67 = vpop.permute.xlu0 %66
  %68 = vset.pattern.permute.xlu0 0
  %69 = vperm.xlu0 %68, %v24
  %v70 = vpop.permute.xlu0 %69
  %71 = vset.pattern.permute.xlu0 0
  %72 = vperm.xlu0 %71, %v25
  %v73 = vpop.permute.xlu0 %72
  %74 = vset.pattern.permute.xlu0 0
  %75 = vperm.xlu0 %74, %v26
  %v76 = vpop.permute.xlu0 %75
  %vm77 = vcmp.eq.s32.totalorder %v31, %v28
  %vm78 = vcmp.eq.s32.totalorder %v34, %v28
  %vm79 = vcmp.eq.s32.totalorder %v37, %v28
  %vm80 = vcmp.eq.s32.totalorder %v40, %v28
  %vm81 = vcmp.eq.s32.totalorder %v43, %v28
  %vm82 = vcmp.eq.s32.totalorder %v46, %v28
  %vm83 = vcmp.eq.s32.totalorder %v49, %v28
  %vm84 = vcmp.eq.s32.totalorder %v52, %v28
  %vm85 = vcmp.eq.s32.totalorder %v55, %v28
  %vm86 = vcmp.eq.s32.totalorder %v58, %v28
  %vm87 = vcmp.eq.s32.totalorder %v61, %v28
  %vm88 = vcmp.eq.s32.totalorder %v64, %v28
  %vm89 = vcmp.eq.s32.totalorder %v67, %v28
  %vm90 = vcmp.eq.s32.totalorder %v70, %v28
  %vm91 = vcmp.eq.s32.totalorder %v73, %v28
  %vm92 = vcmp.eq.s32.totalorder %v76, %v28
  %v93 = vsel %vm77, 1, 0
  %v94 = vsel %vm78, 1, 0
  %v95 = vsel %vm79, 1, 0
  %v96 = vsel %vm80, 1, 0
  %v97 = vsel %vm81, 1, 0
  %v98 = vsel %vm82, 1, 0
  %v99 = vsel %vm83, 1, 0
  %v100 = vsel %vm84, 1, 0
  %v101 = vsel %vm85, 1, 0
  %v102 = vsel %vm86, 1, 0
  %v103 = vsel %vm87, 1, 0
  %v104 = vsel %vm88, 1, 0
  %v105 = vsel %vm89, 1, 0
  %v106 = vsel %vm90, 1, 0
  %v107 = vsel %vm91, 1, 0
  %v108 = vsel %vm92, 1, 0
  %v109 = vcvt.s32.f32 %v93
  %v110 = vcvt.s32.f32 %v94
  %v111 = vcvt.s32.f32 %v95
  %v112 = vcvt.s32.f32 %v96
  %v113 = vcvt.s32.f32 %v97
  %v114 = vcvt.s32.f32 %v98
  %v115 = vcvt.s32.f32 %v99
  %v116 = vcvt.s32.f32 %v100
  %v117 = vcvt.s32.f32 %v101
  %v118 = vcvt.s32.f32 %v102
  %v119 = vcvt.s32.f32 %v103
  %v120 = vcvt.s32.f32 %v104
  %v121 = vcvt.s32.f32 %v105
  %v122 = vcvt.s32.f32 %v106
  %v123 = vcvt.s32.f32 %v107
  %v124 = vcvt.s32.f32 %v108
  %v125 = vld [vmem:[%s1] sm:$0xff]
  %v126 = vld [vmem:[%s1 + $0x8] sm:$0xff]
  %vm127 = vcmask 130048
  %v129 = vsel %vm127, %v109, 0
  %v132 = vsel %vm127, %v110, 0
  %v135 = vsel %vm127, %v111, 0
  %v138 = vsel %vm127, %v112, 0
  %v141 = vsel %vm127, %v113, 0
  %v144 = vsel %vm127, %v114, 0
  %v147 = vsel %vm127, %v115, 0
  %v150 = vsel %vm127, %v116, 0
  %v153 = vsel %vm127, %v117, 0
  %v156 = vsel %vm127, %v118, 0
  %v159 = vsel %vm127, %v119, 0
  %v162 = vsel %vm127, %v120, 0
  %v165 = vsel %vm127, %v121, 0
  %v168 = vsel %vm127, %v122, 0
  %v171 = vsel %vm127, %v123, 0
  %v174 = vsel %vm127, %v124, 0
  %176 = vmatprep.subr.mxu0 0.0
  %177 = vmatpush1.msra.mxu0 %v125
  %178 = vmatprep.subr.mxu0 0.0
  %179 = vmatpush1.msra.mxu0 %v126
  %180 = vmatprep.subr.mxu0 0.0
  %181 = vmatpush1.msra.mxu0 0.0
  %182 = vmatprep.subr.mxu0 0.0
  %183 = vmatpush1.msra.mxu0 0.0
  %184 = vmatprep.subr.mxu0 0.0
  %185 = vmatpush1.msra.mxu0 0.0
  %186 = vmatprep.subr.mxu0 0.0
  %187 = vmatpush1.msra.mxu0 0.0
  %188 = vmatprep.subr.mxu0 0.0
  %189 = vmatpush1.msra.mxu0 0.0
  %190 = vmatprep.subr.mxu0 0.0
  %191 = vmatpush1.msra.mxu0 0.0
  %192 = vmatprep.subr.mxu0 0.0
  %193 = vmatpush1.msra.mxu0 0.0
  %194 = vmatprep.subr.mxu0 0.0
  %195 = vmatpush1.msra.mxu0 0.0
  %196 = vmatprep.subr.mxu0 0.0
  %197 = vmatpush1.msra.mxu0 0.0
  %198 = vmatprep.subr.mxu0 0.0
  %199 = vmatpush1.msra.mxu0 0.0
  %200 = vmatprep.subr.mxu0 0.0
  %201 = vmatpush1.msra.mxu0 0.0
  %202 = vmatprep.subr.mxu0 0.0
  %203 = vmatpush1.msra.mxu0 0.0
  %204 = vmatprep.subr.mxu0 0.0
  %205 = vmatpush1.msra.mxu0 0.0
  %206 = vmatprep.subr.mxu0 0.0
  %207 = vmatpush1.msra.mxu0 0.0
  %208 = vmatprep.subr.mxu0 0.0
  %209 = vmatpush1.msra.mxu0 0.0
  %210 = vmatprep.subr.mxu0 0.0
  %211 = vmatpush1.msra.mxu0 0.0
  %212 = vmatprep.subr.mxu0 0.0
  %213 = vmatpush1.msra.mxu0 0.0
  %214 = vmatprep.subr.mxu0 0.0
  %215 = vmatpush1.msra.mxu0 0.0
  %216 = vmatprep.subr.mxu0 0.0
  %217 = vmatpush1.msra.mxu0 0.0
  %218 = vmatprep.subr.mxu0 0.0
  %219 = vmatpush1.msra.mxu0 0.0
  %220 = vmatprep.subr.mxu0 0.0
  %221 = vmatpush1.msra.mxu0 0.0
  %222 = vmatprep.subr.mxu0 0.0
  %223 = vmatpush1.msra.mxu0 0.0
  %224 = vmatprep.subr.mxu0 0.0
  %225 = vmatpush1.msra.mxu0 0.0
  %226 = vmatprep.subr.mxu0 0.0
  %227 = vmatpush1.msra.mxu0 0.0
  %228 = vmatprep.subr.mxu0 0.0
  %229 = vmatpush1.msra.mxu0 0.0
  %230 = vmatprep.subr.mxu0 0.0
  %231 = vmatpush1.msra.mxu0 0.0
  %232 = vmatprep.subr.mxu0 0.0
  %233 = vmatpush1.msra.mxu0 0.0
  %234 = vmatprep.subr.mxu0 0.0
  %235 = vmatpush1.msra.mxu0 0.0
  %236 = vmatprep.subr.mxu0 0.0
  %237 = vmatpush1.msra.mxu0 0.0
  %238 = vmatprep.subr.mxu0 0.0
  %239 = vmatpush1.msra.mxu0 0.0
  %240 = vmatprep.mubr.f32.mxu0 0.0
  %241 = vmatmul.mubr.f32.gmra.mrb[0].mxu0 %v129
  %v242 = vpop.f32.mrb[0].mxu0
  %v243 = vadd.f32 0.0, %v242
  %v244 = vpop.f32.mrb[0].mxu0
  %245 = vmatprep.mubr.f32.mxu0 0.0
  %246 = vmatmul.mubr.f32.gmra.mrb[0].mxu0 %v132
  %v247 = vpop.f32.mrb[0].mxu0
  %v248 = vadd.f32 0.0, %v247
  %v249 = vpop.f32.mrb[0].mxu0
  %250 = vmatprep.mubr.f32.mxu0 0.0
  %251 = vmatmul.mubr.f32.gmra.mrb[0].mxu0 %v135
  %v252 = vpop.f32.mrb[0].mxu0
  %v253 = vadd.f32 0.0, %v252
  %v254 = vpop.f32.mrb[0].mxu0
  %255 = vmatprep.mubr.f32.mxu0 0.0
  %256 = vmatmul.mubr.f32.gmra.mrb[0].mxu0 %v138
  %v257 = vpop.f32.mrb[0].mxu0
  %v258 = vadd.f32 0.0, %v257
  %v259 = vpop.f32.mrb[0].mxu0
  %260 = vmatprep.mubr.f32.mxu0 0.0
  %261 = vmatmul.mubr.f32.gmra.mrb[0].mxu0 %v141
  %v262 = vpop.f32.mrb[0].mxu0
  %v263 = vadd.f32 0.0, %v262
  %v264 = vpop.f32.mrb[0].mxu0
  %265 = vmatprep.mubr.f32.mxu0 0.0
  %266 = vmatmul.mubr.f32.gmra.mrb[0].mxu0 %v144
  %v267 = vpop.f32.mrb[0].mxu0
  %v268 = vadd.f32 0.0, %v267
  %v269 = vpop.f32.mrb[0].mxu0
  %270 = vmatprep.mubr.f32.mxu0 0.0
  %271 = vmatmul.mubr.f32.gmra.mrb[0].mxu0 %v147
  %v272 = vpop.f32.mrb[0].mxu0
  %v273 = vadd.f32 0.0, %v272
  %v274 = vpop.f32.mrb[0].mxu0
  %275 = vmatprep.mubr.f32.mxu0 0.0
  %276 = vmatmul.mubr.f32.gmra.mrb[0].mxu0 %v150
  %v277 = vpop.f32.mrb[0].mxu0
  %v278 = vadd.f32 0.0, %v277
  %v279 = vpop.f32.mrb[0].mxu0
  %280 = vmatprep.mubr.f32.mxu0 0.0
  %281 = vmatmul.mubr.f32.gmra.mrb[0].mxu0 %v153
  %v282 = vpop.f32.mrb[0].mxu0
  %v283 = vadd.f32 0.0, %v282
  %v284 = vpop.f32.mrb[0].mxu0
  %285 = vmatprep.mubr.f32.mxu0 0.0
  %286 = vmatmul.mubr.f32.gmra.mrb[0].mxu0 %v156
  %v287 = vpop.f32.mrb[0].mxu0
  %v288 = vadd.f32 0.0, %v287
  %v289 = vpop.f32.mrb[0].mxu0
  %290 = vmatprep.mubr.f32.mxu0 0.0
  %291 = vmatmul.mubr.f32.gmra.mrb[0].mxu0 %v159
  %v292 = vpop.f32.mrb[0].mxu0
  %v293 = vadd.f32 0.0, %v292
  %v294 = vpop.f32.mrb[0].mxu0
  %295 = vmatprep.mubr.f32.mxu0 0.0
  %296 = vmatmul.mubr.f32.gmra.mrb[0].mxu0 %v162
  %v297 = vpop.f32.mrb[0].mxu0
  %v298 = vadd.f32 0.0, %v297
  %v299 = vpop.f32.mrb[0].mxu0
  %300 = vmatprep.mubr.f32.mxu0 0.0
  %301 = vmatmul.mubr.f32.gmra.mrb[0].mxu0 %v165
  %v302 = vpop.f32.mrb[0].mxu0
  %v303 = vadd.f32 0.0, %v302
  %v304 = vpop.f32.mrb[0].mxu0
  %305 = vmatprep.mubr.f32.mxu0 0.0
  %306 = vmatmul.mubr.f32.gmra.mrb[0].mxu0 %v168
  %v307 = vpop.f32.mrb[0].mxu0
  %v308 = vadd.f32 0.0, %v307
  %v309 = vpop.f32.mrb[0].mxu0
  %310 = vmatprep.mubr.f32.mxu0 0.0
  %311 = vmatmul.mubr.f32.gmra.mrb[0].mxu0 %v171
  %v312 = vpop.f32.mrb[0].mxu0
  %v313 = vadd.f32 0.0, %v312
  %v314 = vpop.f32.mrb[0].mxu0
  %315 = vmatprep.mubr.f32.mxu0 0.0
  %316 = vmatmul.mubr.f32.gmra.mrb[0].mxu0 %v174
  %v317 = vpop.f32.mrb[0].mxu0
  %v318 = vadd.f32 0.0, %v317
  %v319 = vpop.f32.mrb[0].mxu0
  %320 = vdwg.mxu0
  %vm321 = vcmask 261120
  %322 = vst.msk [vmem:[%s2] sm:$0xff] %vm321, %v243
  %323 = vst.msk [vmem:[%s2 + $0x8] sm:$0xff] %vm321, %v248
  %324 = vst.msk [vmem:[%s2 + $0x10] sm:$0xff] %vm321, %v253
  %325 = vst.msk [vmem:[%s2 + $0x18] sm:$0xff] %vm321, %v258
  %326 = vst.msk [vmem:[%s2 + $0x20] sm:$0xff] %vm321, %v263
  %327 = vst.msk [vmem:[%s2 + $0x28] sm:$0xff] %vm321, %v268
  %328 = vst.msk [vmem:[%s2 + $0x30] sm:$0xff] %vm321, %v273
  %329 = vst.msk [vmem:[%s2 + $0x38] sm:$0xff] %vm321, %v278
  %330 = vst.msk [vmem:[%s2 + $0x40] sm:$0xff] %vm321, %v283
  %331 = vst.msk [vmem:[%s2 + $0x48] sm:$0xff] %vm321, %v288
  %332 = vst.msk [vmem:[%s2 + $0x50] sm:$0xff] %vm321, %v293
  %333 = vst.msk [vmem:[%s2 + $0x58] sm:$0xff] %vm321, %v298
  %334 = vst.msk [vmem:[%s2 + $0x60] sm:$0xff] %vm321, %v303
  %335 = vst.msk [vmem:[%s2 + $0x68] sm:$0xff] %vm321, %v308
  %336 = vst.msk [vmem:[%s2 + $0x70] sm:$0xff] %vm321, %v313
  %337 = vst.msk [vmem:[%s2 + $0x78] sm:$0xff] %vm321, %v318
  // Predicated region
  $region10: #{tpu_custom_call.1} parent=0 // pred_check
    _
  $region11: #{tpu_custom_call.1} parent=0 // pred_check_branch
    %339 = sbr.rel (0) target = $region13
  $region12: #{tpu_custom_call.1} parent=0 // pred_region
    _
  $region13: #{tpu_custom_call.1} parent=0 // pred_fallthru
    _
  // Predicated region
  $region14: #{tpu_custom_call.1} parent=0 // pred_check
    _
  $region15: #{tpu_custom_call.1} parent=0 // pred_check_branch
    %341 = sbr.rel (0) target = $region17
  $region16: #{tpu_custom_call.1} parent=0 // pred_region
    _
  $region17: #{tpu_custom_call.1} parent=0 // pred_fallthru
    _

</llo_original>
